<compile_context>
chip_gen: v5e
topology: v5e:2x2
jax: 0.10.0
libtpu: 0.0.40
codegen_flags: <defaults>
</compile_context>

<pallas_src>
import jax
import jax.numpy as jnp
from jax.experimental import pallas as pl
from jax.experimental.pallas import tpu as pltpu

K_SIGMOID = 0.1


def _h(z):
    # sigmoid(k*z) in tanh form: one EUP transcendental, no full-precision divide.
    return 0.5 * (1.0 + jnp.tanh(0.5 * K_SIGMOID * z))


def _h_ref(z):
    # Literal PyTorch form, used only by the pure-JAX reference.
    return 1.0 / (1.0 + jnp.exp(-K_SIGMOID * z))


def _boxcar_kernel(m_ref, fi_ref, fj_ref, x_ref, o_ref, mask_ref):
    # m_ref   : VMEM (1, g, 4) f32      -- this sample's glimpse box params
    # fi_ref  : VMEM (1, N) f32         -- row index i of each flattened pixel
    # fj_ref  : VMEM (1, N) f32         -- col index j of each flattened pixel
    # x_ref   : VMEM (1, ch, N) f32     -- this sample (resident across g axis)
    # o_ref   : VMEM (1, 1, ch, N) f32  -- one glimpse slab
    # mask_ref: VMEM (g, N) f32 scratch -- all glimpse masks for this sample
    gi = pl.program_id(1)

    # Compute ALL g masks once per sample, batched over g sublanes.
    @pl.when(gi == 0)
    def _():
        mb = m_ref[0]            # (g, 4)
        m0 = mb[:, 0:1]          # (g, 1)
        m1 = mb[:, 1:2]
        m2 = mb[:, 2:3]
        m3 = mb[:, 3:4]
        fi = fi_ref[...]         # (1, N)
        fj = fj_ref[...]         # (1, N)
        mask_ref[...] = ((_h(fi - m0) - _h(fi - m2)) *
                         (_h(fj - m1) - _h(fj - m3)))

    # Remaining work per (sample, glimpse) step: broadcast multiply + store.
    o_ref[0, 0] = x_ref[0] * mask_ref[pl.ds(gi, 1), :]


def boxcar_forward(x, m):
    """x: (s, ch, dim1, dim2), m: (s, g, 4) -> (s, g, ch, dim1, dim2) float32."""
    s, ch, d1, d2 = x.shape
    g = m.shape[1]
    n = d1 * d2
    n_pad = ((n + 127) // 128) * 128        # keep stores lane-dense (unmasked)

    x_flat = x.astype(jnp.float32).reshape(s, ch, n)
    if n_pad != n:
        x_flat = jnp.pad(x_flat, ((0, 0), (0, 0), (0, n_pad - n)))
    m_f32 = m.astype(jnp.float32)

    # The module's f1 / f2 buffers in flattened-pixel coordinates.
    rows = jnp.arange(d1, dtype=jnp.float32)
    cols = jnp.arange(d2, dtype=jnp.float32)
    fi = jnp.repeat(rows, d2)               # i = k // dim2
    fj = jnp.tile(cols, d1)                 # j = k %  dim2
    if n_pad != n:
        fi = jnp.pad(fi, (0, n_pad - n))
        fj = jnp.pad(fj, (0, n_pad - n))
    fi = fi.reshape(1, n_pad)
    fj = fj.reshape(1, n_pad)

    # Per-step VMEM: x block + out block (double-buffered), fi/fj, mask scratch.
    step_bytes = 4 * n_pad * (2 * ch + 2 * ch + 4 + g) + (1 << 20)
    vmem_limit = int(min(max(step_bytes + (8 << 20), 32 << 20), 48 << 20))

    cost = pl.CostEstimate(
        flops=int(s * g * ch * n + 7 * s * g * n),
        transcendentals=int(4 * s * g * n),
        bytes_accessed=int(4 * (s * ch * n + s * g * ch * n + s * g * 4 + 2 * n)),
    )

    out_flat = pl.pallas_call(
        _boxcar_kernel,
        out_shape=jax.ShapeDtypeStruct((s, g, ch, n_pad), jnp.float32),
        grid_spec=pltpu.PrefetchScalarGridSpec(
            num_scalar_prefetch=0,
            grid=(s, g),
            in_specs=[
                # m: one sample's (g, 4) params; constant across the g axis.
                pl.BlockSpec((1, g, 4), lambda si, gi: (si, 0, 0)),
                # fi / fj: fetched once (constant index_map).
                pl.BlockSpec((1, n_pad), lambda si, gi: (0, 0)),
                pl.BlockSpec((1, n_pad), lambda si, gi: (0, 0)),
                # x: per sample, resident across the g axis (no re-DMA per glimpse).
                pl.BlockSpec((1, ch, n_pad), lambda si, gi: (si, 0, 0)),
            ],
            out_specs=pl.BlockSpec((1, 1, ch, n_pad),
                                   lambda si, gi: (si, gi, 0, 0)),
            scratch_shapes=[pltpu.VMEM((g, n_pad), jnp.float32)],
        ),
        compiler_params=pltpu.CompilerParams(
            # g axis must be "arbitrary": the gi==0 mask gate needs sequential
            # glimpse order per sample on a core.
            dimension_semantics=("parallel", "arbitrary"),
            vmem_limit_bytes=vmem_limit,
        ),
        cost_estimate=cost,
    )(m_f32, fi, fj, x_flat)

    out = out_flat[..., :n].reshape(s, g, ch, d1, d2)   # slice pad, free reshape
    return out


def boxcar_ref(x, m):
    # Pure-JAX reference mirroring the PyTorch code, for verification.
    s, ch, d1, d2 = x.shape
    g = m.shape[1]
    i = jnp.arange(d1, dtype=jnp.float32).reshape(1, 1, 1, d1, 1)
    j = jnp.arange(d2, dtype=jnp.float32).reshape(1, 1, 1, 1, d2)
    m = m.astype(jnp.float32)
    m0 = m[:, :, 0].reshape(s, g, 1, 1, 1)
    m1 = m[:, :, 1].reshape(s, g, 1, 1, 1)
    m2 = m[:, :, 2].reshape(s, g, 1, 1, 1)
    m3 = m[:, :, 3].reshape(s, g, 1, 1, 1)
    mask = (_h_ref(i - m0) - _h_ref(i - m2)) * (_h_ref(j - m1) - _h_ref(j - m3))
    return x.astype(jnp.float32).reshape(s, 1, ch, d1, d2) * mask


if __name__ == "__main__":
    # Small shapes consistent with BoxCar(ch, dim1, dim2): s=2, ch=4, 16x16, g=3.
    s, ch, d1, d2, g = 2, 4, 16, 16, 3
    key = jax.random.PRNGKey(0)
    kx, km = jax.random.split(key)
    x = jax.random.normal(kx, (s, ch, d1, d2), dtype=jnp.float32)
    # Glimpse box parameters in pixel coordinates [0, dim).
    m = jax.random.uniform(km, (s, g, 4), dtype=jnp.float32,
                           minval=0.0, maxval=float(d1))

    out = boxcar_forward(x, m)
    out = jax.block_until_ready(out)

    ref = boxcar_ref(x, m)
    assert out.shape == (s, g, ch, d1, d2)
    assert jnp.allclose(out, ref, atol=1e-5, rtol=1e-5), "mismatch vs reference"

    print("KERNEL_OK")
</pallas_src>

<mosaic_0001>
module attributes {stable_mosaic.version = 11 : i64} {
  func.func @_boxcar_kernel(%arg0: i32, %arg1: i32, %arg2: memref<1x3x4xf32, #tpu.memory_space<vmem>>, %arg3: memref<1x256xf32, #tpu.memory_space<vmem>>, %arg4: memref<1x256xf32, #tpu.memory_space<vmem>>, %arg5: memref<1x4x256xf32, #tpu.memory_space<vmem>>, %arg6: memref<1x1x4x256xf32, #tpu.memory_space<vmem>>, %arg7: memref<3x256xf32, #tpu.memory_space<vmem>>) attributes {dimension_semantics = [#tpu.dimension_semantics<parallel>, #tpu.dimension_semantics<arbitrary>], iteration_bounds = array<i64: 2, 3>, scalar_prefetch = 0 : i64, scratch_operands = 1 : i64, tpu.core_type = #tpu.core_type<tc>, window_params = [{transform_indices = @transform_0, window_bounds = array<i64: 1, 3, 4>}, {pipeline_mode = #tpu.pipeline_mode<synchronous>, transform_indices = @transform_1, window_bounds = array<i64: 1, 256>}, {pipeline_mode = #tpu.pipeline_mode<synchronous>, transform_indices = @transform_2, window_bounds = array<i64: 1, 256>}, {transform_indices = @transform_3, window_bounds = array<i64: 1, 4, 256>}, {transform_indices = @transform_4, window_bounds = array<i64: 1, 1, 4, 256>}]} {
    %c0_i32 = arith.constant 0 : i32
    %0 = arith.cmpi eq, %arg1, %c0_i32 : i32
    %1 = arith.extui %0 : i1 to i32
    %c0_i32_0 = arith.constant 0 : i32
    %2 = arith.cmpi ne, %1, %c0_i32_0 : i32
    scf.if %2 {
      %c0_8 = arith.constant 0 : index
      %c0_9 = arith.constant 0 : index
      %c0_10 = arith.constant 0 : index
      %12 = vector.load %arg2[%c0_8, %c0_9, %c0_10] : memref<1x3x4xf32, #tpu.memory_space<vmem>>, vector<1x3x4xf32>
      %13 = vector.shape_cast %12 : vector<1x3x4xf32> to vector<3x4xf32>
      %14 = vector.extract_strided_slice %13 {offsets = [0, 0], sizes = [3, 1], strides = [1, 1]} : vector<3x4xf32> to vector<3x1xf32>
      %15 = vector.extract_strided_slice %13 {offsets = [0, 1], sizes = [3, 1], strides = [1, 1]} : vector<3x4xf32> to vector<3x1xf32>
      %16 = vector.extract_strided_slice %13 {offsets = [0, 2], sizes = [3, 1], strides = [1, 1]} : vector<3x4xf32> to vector<3x1xf32>
      %17 = vector.extract_strided_slice %13 {offsets = [0, 3], sizes = [3, 1], strides = [1, 1]} : vector<3x4xf32> to vector<3x1xf32>
      %c0_11 = arith.constant 0 : index
      %c0_12 = arith.constant 0 : index
      %18 = vector.load %arg3[%c0_11, %c0_12] : memref<1x256xf32, #tpu.memory_space<vmem>>, vector<1x256xf32>
      %c0_13 = arith.constant 0 : index
      %c0_14 = arith.constant 0 : index
      %19 = vector.load %arg4[%c0_13, %c0_14] : memref<1x256xf32, #tpu.memory_space<vmem>>, vector<1x256xf32>
      %20 = vector.broadcast %18 : vector<1x256xf32> to vector<3x256xf32>
      %21 = vector.broadcast %14 : vector<3x1xf32> to vector<3x256xf32>
      %22 = arith.subf %20, %21 : vector<3x256xf32>
      %cst = arith.constant 5.000000e-02 : f32
      %23 = vector.broadcast %cst : f32 to vector<3x256xf32>
      %24 = arith.mulf %23, %22 : vector<3x256xf32>
      %25 = math.tanh %24 : vector<3x256xf32>
      %cst_15 = arith.constant 1.000000e+00 : f32
      %26 = vector.broadcast %cst_15 : f32 to vector<3x256xf32>
      %27 = arith.addf %26, %25 : vector<3x256xf32>
      %cst_16 = arith.constant 5.000000e-01 : f32
      %28 = vector.broadcast %cst_16 : f32 to vector<3x256xf32>
      %29 = arith.mulf %28, %27 : vector<3x256xf32>
      %30 = vector.broadcast %18 : vector<1x256xf32> to vector<3x256xf32>
      %31 = vector.broadcast %16 : vector<3x1xf32> to vector<3x256xf32>
      %32 = arith.subf %30, %31 : vector<3x256xf32>
      %cst_17 = arith.constant 5.000000e-02 : f32
      %33 = vector.broadcast %cst_17 : f32 to vector<3x256xf32>
      %34 = arith.mulf %33, %32 : vector<3x256xf32>
      %35 = math.tanh %34 : vector<3x256xf32>
      %cst_18 = arith.constant 1.000000e+00 : f32
      %36 = vector.broadcast %cst_18 : f32 to vector<3x256xf32>
      %37 = arith.addf %36, %35 : vector<3x256xf32>
      %cst_19 = arith.constant 5.000000e-01 : f32
      %38 = vector.broadcast %cst_19 : f32 to vector<3x256xf32>
      %39 = arith.mulf %38, %37 : vector<3x256xf32>
      %40 = arith.subf %29, %39 : vector<3x256xf32>
      %41 = vector.broadcast %19 : vector<1x256xf32> to vector<3x256xf32>
      %42 = vector.broadcast %15 : vector<3x1xf32> to vector<3x256xf32>
      %43 = arith.subf %41, %42 : vector<3x256xf32>
      %cst_20 = arith.constant 5.000000e-02 : f32
      %44 = vector.broadcast %cst_20 : f32 to vector<3x256xf32>
      %45 = arith.mulf %44, %43 : vector<3x256xf32>
      %46 = math.tanh %45 : vector<3x256xf32>
      %cst_21 = arith.constant 1.000000e+00 : f32
      %47 = vector.broadcast %cst_21 : f32 to vector<3x256xf32>
      %48 = arith.addf %47, %46 : vector<3x256xf32>
      %cst_22 = arith.constant 5.000000e-01 : f32
      %49 = vector.broadcast %cst_22 : f32 to vector<3x256xf32>
      %50 = arith.mulf %49, %48 : vector<3x256xf32>
      %51 = vector.broadcast %19 : vector<1x256xf32> to vector<3x256xf32>
      %52 = vector.broadcast %17 : vector<3x1xf32> to vector<3x256xf32>
      %53 = arith.subf %51, %52 : vector<3x256xf32>
      %cst_23 = arith.constant 5.000000e-02 : f32
      %54 = vector.broadcast %cst_23 : f32 to vector<3x256xf32>
      %55 = arith.mulf %54, %53 : vector<3x256xf32>
      %56 = math.tanh %55 : vector<3x256xf32>
      %cst_24 = arith.constant 1.000000e+00 : f32
      %57 = vector.broadcast %cst_24 : f32 to vector<3x256xf32>
      %58 = arith.addf %57, %56 : vector<3x256xf32>
      %cst_25 = arith.constant 5.000000e-01 : f32
      %59 = vector.broadcast %cst_25 : f32 to vector<3x256xf32>
      %60 = arith.mulf %59, %58 : vector<3x256xf32>
      %61 = arith.subf %50, %60 : vector<3x256xf32>
      %62 = arith.mulf %40, %61 : vector<3x256xf32>
      %c0_26 = arith.constant 0 : index
      %c0_27 = arith.constant 0 : index
      %63 = vector.load %arg7[%c0_26, %c0_27] : memref<3x256xf32, #tpu.memory_space<vmem>>, vector<3x256xf32>
      tpu.vector_store %arg7[%c0_26, %c0_27], %62 {strides = array<i32>} : memref<3x256xf32, #tpu.memory_space<vmem>>, vector<3x256xf32>,
    } else {
    }
    %c0 = arith.constant 0 : index
    %c0_1 = arith.constant 0 : index
    %c0_2 = arith.constant 0 : index
    %3 = vector.load %arg5[%c0, %c0_1, %c0_2] : memref<1x4x256xf32, #tpu.memory_space<vmem>>, vector<1x4x256xf32>
    %4 = vector.shape_cast %3 : vector<1x4x256xf32> to vector<4x256xf32>
    %5 = arith.index_cast %arg1 : i32 to index
    %c0_3 = arith.constant 0 : index
    %6 = vector.load %arg7[%5, %c0_3] : memref<3x256xf32, #tpu.memory_space<vmem>>, vector<1x256xf32>
    %7 = vector.broadcast %6 : vector<1x256xf32> to vector<4x256xf32>
    %8 = arith.mulf %4, %7 : vector<4x256xf32>
    %c0_4 = arith.constant 0 : index
    %c0_5 = arith.constant 0 : index
    %c0_6 = arith.constant 0 : index
    %c0_7 = arith.constant 0 : index
    %9 = vector.load %arg6[%c0_4, %c0_5, %c0_6, %c0_7] : memref<1x1x4x256xf32, #tpu.memory_space<vmem>>, vector<1x1x4x256xf32>
    %10 = vector.shape_cast %9 : vector<1x1x4x256xf32> to vector<4x256xf32>
    %11 = vector.shape_cast %8 : vector<4x256xf32> to vector<1x1x4x256xf32>
    tpu.vector_store %arg6[%c0_4, %c0_5, %c0_6, %c0_7], %11 {strides = array<i32>} : memref<1x1x4x256xf32, #tpu.memory_space<vmem>>, vector<1x1x4x256xf32>,
    return
  }
  func.func @transform_0(%arg0: i32, %arg1: i32) -> (i32, i32, i32) {
    %c0_i32 = arith.constant 0 : i32
    %c0_i32_0 = arith.constant 0 : i32
    %c0_i32_1 = arith.constant 0 : i32
    return %arg0, %c0_i32, %c0_i32_0 : i32, i32, i32
  }
  func.func @transform_1(%arg0: i32, %arg1: i32) -> (i32, i32) {
    %c0_i32 = arith.constant 0 : i32
    %c0_i32_0 = arith.constant 0 : i32
    %c0_i32_1 = arith.constant 0 : i32
    return %c0_i32, %c0_i32_0 : i32, i32
  }
  func.func @transform_2(%arg0: i32, %arg1: i32) -> (i32, i32) {
    %c0_i32 = arith.constant 0 : i32
    %c0_i32_0 = arith.constant 0 : i32
    %c0_i32_1 = arith.constant 0 : i32
    return %c0_i32, %c0_i32_0 : i32, i32
  }
  func.func @transform_3(%arg0: i32, %arg1: i32) -> (i32, i32, i32) {
    %c0_i32 = arith.constant 0 : i32
    %c0_i32_0 = arith.constant 0 : i32
    %c0_i32_1 = arith.constant 0 : i32
    return %arg0, %c0_i32, %c0_i32_0 : i32, i32, i32
  }
  func.func @transform_4(%arg0: i32, %arg1: i32) -> (i32, i32, i32, i32) {
    %c0_i32 = arith.constant 0 : i32
    %c0_i32_0 = arith.constant 0 : i32
    %c0_i32_1 = arith.constant 0 : i32
    return %arg0, %arg1, %c0_i32, %c0_i32_0 : i32, i32, i32, i32
  }
}

</mosaic_0001>

<llo_original>
// kernel: tpu_custom_call.1
$region0: #{tpu_custom_call.1}
  #allocation0 [shape = 'u32[]', space=smem, size = 0x4, offset = 0x4, fixed_abs, tag = 'smem constant byte address 0x4 - core index']
  #allocation1 [shape = 'u32[72,128]{1,0:T(1,128)}', space=vmem, size = 0x9000, scoped, tag = 'internal scratch']
  #allocation2 [shape = 'f32[3,256]{1,0:T(4,128)}', space=vmem, size = 0x1000, scoped, tag = 'scratch operand']
  %s0 = inlined_call_operand.vmem [shape: f32[2,3,4], index: 0, kind: input, shape index: {}]
  %s1 = inlined_call_operand.hbm [shape: f32[1,256], index: 1, kind: input, shape index: {}]
  %s2 = inlined_call_operand.hbm [shape: f32[1,256], index: 2, kind: input, shape index: {}]
  %s3 = inlined_call_operand.vmem [shape: f32[2,4,256], index: 3, kind: input, shape index: {}]
  %s4 = inlined_call_operand.hbm [shape: f32[2,3,4,256], index: 4, kind: output, shape index: {}]
  %s5 = sld [smem:[#allocation0]]
  $region61: #{tpu_custom_call.1} parent=0
    _
  %s7 = ssub.s32 1, %s5
  %s8 = scalar_select 0, %s7, %s5
  $region1: #{tpu_custom_call.1} parent=0
    #allocation3 [shape = 'u8[1024]{0}', space=vmem, size = 0x400, scoped, tag = 'input window, operand 1, single buffered']
    #allocation4 [shape = 's32[2]{0}', space=sflag, size = 0x8, scoped, tag = 'scoped memory for tpu_custom_call.1']
    #allocation5 [shape = 's32[2]{0}', space=sflag, size = 0x8, scoped, tag = 'scoped memory for tpu_custom_call.1']
    #allocation6 [shape = 'u8[1024]{0}', space=vmem, size = 0x400, scoped, tag = 'input window, operand 2, single buffered']
    #allocation7 [shape = 's32[1]{0}', space=sflag, size = 0x4, scoped, tag = 'scoped memory for tpu_custom_call.1']
    #allocation8 [shape = 'u8[8192]{0}', space=vmem, size = 0x2000, scoped, tag = 'output window, operand 0']
    %9 = vsyncpa [#allocation4], 0
    %10 = vsyncpa [#allocation7], 0
    %11 = vsyncpa [#allocation5], 0
    %s12 = scalar_lea.sflag [#allocation5], 1
    %13 = vsyncpa %s12, 0
    loop: start=0, step=1, limit=8
    $region2: #{tpu_custom_call.1} parent=1 // loop_pre_header
      _
    $region3: #{tpu_custom_call.1} parent=1 // loop_header
      %s15 = sphi 0, %s19
      %p16 = scmp.ge.s32.totalorder %s15, 8
      %s22 = sphi 0, %s34
      %s23 = sphi 0, %s30
      %s24 = sphi 0, %s22
      %s25 = sphi 0, %s23
      %s26 = sphi 0, %s24
      %s27 = sphi 0, %s25
      %s37 = sphi 0, %s39
      %s40 = sphi 0, %s37
      %s41 = sphi 0, %s40
      %s57 = sphi 0, %s41
      %s61 = sphi 0, %s61
      %s63 = sphi 0, %s61
      %s64 = sphi 0, %s63
      %s78 = sphi 0, %s64
      %s82 = sphi 0, %s82
      %s84 = sphi 0, %s82
      %s85 = sphi 0, %s84
      %s99 = sphi 0, %s85
      %s105 = sphi 0, %s107
      %s108 = sphi 0, %s105
      %s109 = sphi 0, %s108
      %s125 = sphi 0, %s109
      %s133 = sphi 0, %s135
      %s136 = sphi 0, %s133
      %s137 = sphi 0, %s136
      %s153 = sphi 0, %s137
    $region4: #{tpu_custom_call.1} parent=1 // loop_header_branch
      %18 = sbr.rel (%p16) target = $region8
    $region5: #{tpu_custom_call.1} parent=1 // loop_body
      %s20 = ssub.s32 %s15, 1
      %s21 = ssub.s32 %s15, 2
      %s28 = sadd.s32 1, %s23
      %p29 = scmp.ge.s32.totalorder %s28, 3
      %s30 = scalar_select %p29, 0, %s28
      %s31 = sadd.s32 1, %s22
      %s32 = scalar_select %p29, %s31, %s22
      %p33 = scmp.ge.s32.totalorder %s32, 2
      %s34 = scalar_select %p33, 0, %s32
      %s35 = ssub.s32 %s22, %s34
      %p36 = scmp.eq.s32.totalorder %s35, 0
      %s38 = sadd.s32 %s37, 1
      %s39 = scalar_select %p36, %s37, %s38
      %p42 = pneg %p36
      %p43 = scmp.eq.s32.totalorder %s15, 5
      %p44 = por %p42, %p43
      %p45 = scmp.ne.s32.totalorder %s37, %s40
      %p46 = scmp.eq.s32.totalorder %s15, 0
      %p47 = por %p45, %p46
      %p48 = scmp.ne.s32.totalorder %s37, %s40
      %p49 = scmp.eq.s32.totalorder %s20, 5
      %p50 = por %p48, %p49
      %p51 = scmp.ne.s32.totalorder %s40, %s41
      %p52 = scmp.eq.s32.totalorder %s20, 0
      %p53 = por %p51, %p52
      %p54 = scmp.ne.s32.totalorder %s40, %s41
      %p55 = scmp.eq.s32.totalorder %s21, 5
      %p56 = por %p54, %p55
      %p58 = scmp.ne.s32.totalorder %s41, %s57
      %p59 = scmp.eq.s32.totalorder %s21, 0
      %p60 = por %p58, %p59
      %s62 = sadd.s32 %s61, 1
      %p65 = scmp.eq.s32.totalorder %s15, 5
      %p66 = scmp.ne.s32.totalorder %s61, %s63
      %p67 = scmp.eq.s32.totalorder %s15, 0
      %p68 = por %p66, %p67
      %p69 = scmp.ne.s32.totalorder %s61, %s63
      %p70 = scmp.eq.s32.totalorder %s20, 5
      %p71 = por %p69, %p70
      %p72 = scmp.ne.s32.totalorder %s63, %s64
      %p73 = scmp.eq.s32.totalorder %s20, 0
      %p74 = por %p72, %p73
      %p75 = scmp.ne.s32.totalorder %s63, %s64
      %p76 = scmp.eq.s32.totalorder %s21, 5
      %p77 = por %p75, %p76
      %p79 = scmp.ne.s32.totalorder %s64, %s78
      %p80 = scmp.eq.s32.totalorder %s21, 0
      %p81 = por %p79, %p80
      %s83 = sadd.s32 %s82, 1
      %p86 = scmp.eq.s32.totalorder %s15, 5
      %p87 = scmp.ne.s32.totalorder %s82, %s84
      %p88 = scmp.eq.s32.totalorder %s15, 0
      %p89 = por %p87, %p88
      %p90 = scmp.ne.s32.totalorder %s82, %s84
      %p91 = scmp.eq.s32.totalorder %s20, 5
      %p92 = por %p90, %p91
      %p93 = scmp.ne.s32.totalorder %s84, %s85
      %p94 = scmp.eq.s32.totalorder %s20, 0
      %p95 = por %p93, %p94
      %p96 = scmp.ne.s32.totalorder %s84, %s85
      %p97 = scmp.eq.s32.totalorder %s21, 5
      %p98 = por %p96, %p97
      %p100 = scmp.ne.s32.totalorder %s85, %s99
      %p101 = scmp.eq.s32.totalorder %s21, 0
      %p102 = por %p100, %p101
      %s103 = ssub.s32 %s22, %s34
      %p104 = scmp.eq.s32.totalorder %s103, 0
      %s106 = sadd.s32 %s105, 1
      %s107 = scalar_select %p104, %s105, %s106
      %p110 = pneg %p104
      %p111 = scmp.eq.s32.totalorder %s15, 5
      %p112 = por %p110, %p111
      %p113 = scmp.ne.s32.totalorder %s105, %s108
      %p114 = scmp.eq.s32.totalorder %s15, 0
      %p115 = por %p113, %p114
      %p116 = scmp.ne.s32.totalorder %s105, %s108
      %p117 = scmp.eq.s32.totalorder %s20, 5
      %p118 = por %p116, %p117
      %p119 = scmp.ne.s32.totalorder %s108, %s109
      %p120 = scmp.eq.s32.totalorder %s20, 0
      %p121 = por %p119, %p120
      %p122 = scmp.ne.s32.totalorder %s108, %s109
      %p123 = scmp.eq.s32.totalorder %s21, 5
      %p124 = por %p122, %p123
      %p126 = scmp.ne.s32.totalorder %s109, %s125
      %p127 = scmp.eq.s32.totalorder %s21, 0
      %p128 = por %p126, %p127
      %s129 = ssub.s32 %s22, %s34
      %s130 = ssub.s32 %s23, %s30
      %s131 = sor.u32 %s129, %s130
      %p132 = scmp.eq.s32.totalorder %s131, 0
      %s134 = sadd.s32 %s133, 1
      %s135 = scalar_select %p132, %s133, %s134
      %p138 = pneg %p132
      %p139 = scmp.eq.s32.totalorder %s15, 5
      %p140 = por %p138, %p139
      %p141 = scmp.ne.s32.totalorder %s133, %s136
      %p142 = scmp.eq.s32.totalorder %s15, 0
      %p143 = por %p141, %p142
      %p144 = scmp.ne.s32.totalorder %s133, %s136
      %p145 = scmp.eq.s32.totalorder %s20, 5
      %p146 = por %p144, %p145
      %p147 = scmp.ne.s32.totalorder %s136, %s137
      %p148 = scmp.eq.s32.totalorder %s20, 0
      %p149 = por %p147, %p148
      %p150 = scmp.ne.s32.totalorder %s136, %s137
      %p151 = scmp.eq.s32.totalorder %s21, 5
      %p152 = por %p150, %p151
      %p154 = scmp.ne.s32.totalorder %s137, %s153
      %p155 = scmp.eq.s32.totalorder %s21, 0
      %p156 = por %p154, %p155
      %p157 = scmp.le.s32.totalorder 1, %s15
      %p158 = scmp.lt.s32.totalorder %s15, 7
      %p159 = pnand %p157, %p158
      %p160 = pneg %p159
      // Predicated region
      $region9: #{tpu_custom_call.1} parent=5 // pred_check
        _
      $region10: #{tpu_custom_call.1} parent=5 // pred_check_branch
        %162 = sbr.rel (%p159) target = $region12
      $region11: #{tpu_custom_call.1} parent=5 // pred_region
        %s163 = ssub.s32 %s15, 1
        // Predicated region
        $region13: #{tpu_custom_call.1} parent=11 // pred_check
          %p164 = pneg %p74
        $region14: #{tpu_custom_call.1} parent=11 // pred_check_branch
          %166 = sbr.rel (%p164) target = $region16
        $region15: #{tpu_custom_call.1} parent=11 // pred_region
          %168 = vsyncadd [#allocation4], 0
          %s170 = sshll.u32 %s1, 4
          %s171 = int_to_ptr.hbm [resolvable:$true] %s170
          %s172 = sshll.u32 [#allocation3], 4
          %s173 = int_to_ptr.vmem [resolvable:$true] %s172
          %175 = dma.hbm_to_vmem [thread:$0]  %s171, 32, %s173, [#allocation4]
        $region16: #{tpu_custom_call.1} parent=11 // pred_fallthru
          _
        // Predicated region
        $region17: #{tpu_custom_call.1} parent=11 // pred_check
          %p176 = pneg %p95
        $region18: #{tpu_custom_call.1} parent=11 // pred_check_branch
          %178 = sbr.rel (%p176) target = $region20
        $region19: #{tpu_custom_call.1} parent=11 // pred_region
          %180 = vsyncadd [#allocation7], 0
          %s182 = sshll.u32 %s2, 4
          %s183 = int_to_ptr.hbm [resolvable:$true] %s182
          %s184 = sshll.u32 [#allocation6], 4
          %s185 = int_to_ptr.vmem [resolvable:$true] %s184
          %187 = dma.hbm_to_vmem [thread:$0]  %s183, 32, %s185, [#allocation7]
        $region20: #{tpu_custom_call.1} parent=11 // pred_fallthru
          _
      $region12: #{tpu_custom_call.1} parent=5 // pred_fallthru
        _
      %p188 = scmp.lt.s32.totalorder %s15, 6
      // Predicated region
      $region21: #{tpu_custom_call.1} parent=5 // pred_check
        %p189 = pneg %p188
      $region22: #{tpu_custom_call.1} parent=5 // pred_check_branch
        %191 = sbr.rel (%p189) target = $region24
      $region23: #{tpu_custom_call.1} parent=5 // pred_region
        // Predicated region
        $region25: #{tpu_custom_call.1} parent=23 // pred_check
          %p192 = pneg %p47
        $region26: #{tpu_custom_call.1} parent=23 // pred_check_branch
          %194 = sbr.rel (%p192) target = $region28
        $region27: #{tpu_custom_call.1} parent=23 // pred_region
          %p195 = scmp.lt.s32.totalorder %s22, 1
          %s196 = scalar_select %p195, %s22, 1
          %s197 = smul.addr %s196, 4
          %s198 = scalar_lea.vmem %s0, %s197
        $region28: #{tpu_custom_call.1} parent=23 // pred_fallthru
          _
        // Predicated region
        $region29: #{tpu_custom_call.1} parent=23 // pred_check
          %p199 = pneg %p115
        $region30: #{tpu_custom_call.1} parent=23 // pred_check_branch
          %201 = sbr.rel (%p199) target = $region32
        $region31: #{tpu_custom_call.1} parent=23 // pred_region
          %p202 = scmp.lt.s32.totalorder %s22, 1
          %s203 = scalar_select %p202, %s22, 1
          %s204 = smul.addr %s203, 2
          %s205 = smul.addr %s204, 4
          %s206 = scalar_lea.vmem %s3, %s205
        $region32: #{tpu_custom_call.1} parent=23 // pred_fallthru
          _
      $region24: #{tpu_custom_call.1} parent=5 // pred_fallthru
        _
      %p207 = scmp.le.s32.totalorder 1, %s15
      %p208 = scmp.lt.s32.totalorder %s15, 7
      %p209 = pnand %p207, %p208
      %p210 = pneg %p209
      // Predicated region
      $region33: #{tpu_custom_call.1} parent=5 // pred_check
        _
      $region34: #{tpu_custom_call.1} parent=5 // pred_check_branch
        %212 = sbr.rel (%p209) target = $region36
      $region35: #{tpu_custom_call.1} parent=5 // pred_region
        %s213 = ssub.s32 %s15, 1
        // Predicated region
        $region37: #{tpu_custom_call.1} parent=35 // pred_check
          %p214 = pneg %p74
        $region38: #{tpu_custom_call.1} parent=35 // pred_check_branch
          %216 = sbr.rel (%p214) target = $region40
        $region39: #{tpu_custom_call.1} parent=35 // pred_region
          %218 = dma.done [#allocation4], 32
        $region40: #{tpu_custom_call.1} parent=35 // pred_fallthru
          _
        // Predicated region
        $region41: #{tpu_custom_call.1} parent=35 // pred_check
          %p219 = pneg %p95
        $region42: #{tpu_custom_call.1} parent=35 // pred_check_branch
          %221 = sbr.rel (%p219) target = $region44
        $region43: #{tpu_custom_call.1} parent=35 // pred_region
          %223 = dma.done [#allocation7], 32
        $region44: #{tpu_custom_call.1} parent=35 // pred_fallthru
          _
        %p224 = scmp.lt.s32.totalorder %s24, 1
        %s225 = scalar_select %p224, %s24, 1
        %s226 = smul.addr %s225, 4
        %s227 = scalar_lea.vmem %s0, %s226
        %p228 = pneg %p53
        %p229 = pneg %p50
        %p230 = pneg %p74
        %p231 = pneg %p71
        %p232 = pneg %p95
        %p233 = pneg %p92
        %p234 = scmp.lt.s32.totalorder %s24, 1
        %s235 = scalar_select %p234, %s24, 1
        %s236 = smul.addr %s235, 2
        %s237 = smul.addr %s236, 4
        %s238 = scalar_lea.vmem %s3, %s237
        %p239 = pneg %p121
        %p240 = pneg %p118
        %p241 = pneg %p149
        %p242 = pneg %p146
        %s243 = sand.u32 %s136, 1
        %s244 = scalar_lea.sflag [#allocation5], %s243
        %s245 = sand.u32 %s136, 1
        %s246 = smul.addr %s245, 8
        %s247 = scalar_lea.vmem [#allocation8], %s246
        %p248 = scmp.lt.s32.totalorder %s24, 1
        %s249 = scalar_select %p248, %s24, 1
        %s250 = smul.addr %s249, 4
        %s251 = scalar_lea.vmem %s0, %s250
        %p252 = scmp.lt.s32.totalorder %s24, 1
        %s253 = scalar_select %p252, %s24, 1
        %s254 = smul.addr %s253, 2
        %s255 = smul.addr %s254, 4
        %s256 = scalar_lea.vmem %s3, %s255
        %p257 = scmp.eq.s32.totalorder %s25, 0
        // Predicated region
        $region45: #{tpu_custom_call.1} parent=35 // pred_check
          %p258 = pneg %p257
        $region46: #{tpu_custom_call.1} parent=35 // pred_check_branch
          %260 = sbr.rel (%p258) target = $region48
        $region47: #{tpu_custom_call.1} parent=35 // pred_region
          %v261 = vld [vmem:[%s251] sm:$0x7]
          %v262 = vld [vmem:[#allocation3] sm:$0x3]
          %v263 = vld [vmem:[#allocation6] sm:$0x3]
          %v265 = vperm.slane %v262, 0
          %v266 = vperm.slane %v262, 1
          %270 = vset.pattern.permute.xlu0 0
          %271 = vperm.xlu0 %270, %v261
          %v272 = vpop.permute.xlu0 %271
          %v274 = vsub.f32 %v265, %v272
          %v275 = vsub.f32 %v266, %v272
          %v276 = vmul.f32 %v274, 0.05
          %v277 = vmul.f32 %v275, 0.05
          %v278 = vtanh.pop %v276
          %v279 = vtanh.pop %v277
          %v280 = vadd.f32 %v278, 1.0
          %v281 = vadd.f32 %v279, 1.0
          %v282 = vmul.f32 %v280, 0.5
          %v283 = vmul.f32 %v281, 0.5
          %284 = vset.pattern.permute.xlu0 2
          %285 = vperm.xlu0 %284, %v261
          %v286 = vpop.permute.xlu0 %285
          %v288 = vsub.f32 %v265, %v286
          %v289 = vsub.f32 %v266, %v286
          %v290 = vmul.f32 %v288, 0.05
          %v291 = vmul.f32 %v289, 0.05
          %v292 = vtanh.pop %v290
          %v293 = vtanh.pop %v291
          %v294 = vadd.f32 %v292, 1.0
          %v295 = vadd.f32 %v293, 1.0
          %v296 = vmul.f32 %v294, 0.5
          %v297 = vmul.f32 %v295, 0.5
          %v298 = vsub.f32 %v282, %v296
          %v299 = vsub.f32 %v283, %v297
          %v301 = vperm.slane %v263, 0
          %v302 = vperm.slane %v263, 1
          %305 = vset.pattern.permute.xlu0 1
          %306 = vperm.xlu0 %305, %v261
          %v307 = vpop.permute.xlu0 %306
          %v309 = vsub.f32 %v301, %v307
          %v310 = vsub.f32 %v302, %v307
          %v311 = vmul.f32 %v309, 0.05
          %v312 = vmul.f32 %v310, 0.05
          %v313 = vtanh.pop %v311
          %v314 = vtanh.pop %v312
          %v315 = vadd.f32 %v313, 1.0
          %v316 = vadd.f32 %v314, 1.0
          %v317 = vmul.f32 %v315, 0.5
          %v318 = vmul.f32 %v316, 0.5
          %319 = vset.pattern.permute.xlu0 3
          %320 = vperm.xlu0 %319, %v261
          %v321 = vpop.permute.xlu0 %320
          %v323 = vsub.f32 %v301, %v321
          %v324 = vsub.f32 %v302, %v321
          %v325 = vmul.f32 %v323, 0.05
          %v326 = vmul.f32 %v324, 0.05
          %v327 = vtanh.pop %v325
          %v328 = vtanh.pop %v326
          %v329 = vadd.f32 %v327, 1.0
          %v330 = vadd.f32 %v328, 1.0
          %v331 = vmul.f32 %v329, 0.5
          %v332 = vmul.f32 %v330, 0.5
          %v333 = vsub.f32 %v317, %v331
          %v334 = vsub.f32 %v318, %v332
          %v335 = vmul.f32 %v298, %v333
          %v336 = vmul.f32 %v299, %v334
          %v339 = vrot.slane %v336, 4
          %vm340 = vcmask 1043456
          %v341 = vsel %vm340, %v335, %v339
          %343 = vst [vmem:[#allocation2] sm:$0x77] %v341
        $region48: #{tpu_custom_call.1} parent=35 // pred_fallthru
          _
        %v344 = vld [vmem:[%s256] sm:$0xff]
        %s345 = sshra.s32 %s25, 2
        %s346 = sand.u32 %s25, 3
        %s347 = sshra.s32 %s25, 2
        %s348 = sand.u32 %s25, 3
        %s349 = smul.u32 %s345, 2
        %s350 = smul.u32 %s349, 4
        %s351 = sadd.s32 %s350, %s348
        %s352 = scalar_lea.vmem [#allocation2], %s351
        %v353 = vld [vmem:[%s352] ss:$4 sm:$0x3]
        %v355 = vperm.slane %v353, 0
        %v356 = vperm.slane %v353, 1
        %v357 = vrot.slane %v356, 4
        %vm358 = vcmask 1043456
        %v359 = vsel %vm358, %v355, %v357
        %v361 = vmul.f32 %v344, %v359
        %362 = vst [vmem:[%s247] sm:$0xff] %v361
        %s363 = sand.u32 %s136, 1
        %s364 = scalar_lea.sflag [#allocation5], %s363
        %s365 = sand.u32 %s136, 1
        %s366 = smul.addr %s365, 8
        %s367 = scalar_lea.vmem [#allocation8], %s366
        // Predicated region
        $region49: #{tpu_custom_call.1} parent=35 // pred_check
          %p368 = pneg %p146
        $region50: #{tpu_custom_call.1} parent=35 // pred_check_branch
          %370 = sbr.rel (%p368) target = $region52
        $region51: #{tpu_custom_call.1} parent=35 // pred_region
          %372 = vsyncadd %s364, 0
          %s373 = smul.addr %s25, 2
          %s374 = smul.addr %s24, 6
          %s375 = sadd.s32 %s373, %s374
          %s376 = smul.addr %s375, 4
          %s377 = scalar_lea.hbm %s4, %s376
          %s379 = sshll.u32 %s367, 4
          %s380 = int_to_ptr.vmem [resolvable:$true] %s379
          %s381 = sshll.u32 %s377, 4
          %s382 = int_to_ptr.hbm [resolvable:$true] %s381
          %384 = dma.vmem_to_hbm [thread:$0]  %s380, 128, %s382, %s364
        $region52: #{tpu_custom_call.1} parent=35 // pred_fallthru
          _
      $region36: #{tpu_custom_call.1} parent=5 // pred_fallthru
        _
      %p385 = scmp.le.s32.totalorder 2, %s15
      // Predicated region
      $region53: #{tpu_custom_call.1} parent=5 // pred_check
        %p386 = pneg %p385
      $region54: #{tpu_custom_call.1} parent=5 // pred_check_branch
        %388 = sbr.rel (%p386) target = $region56
      $region55: #{tpu_custom_call.1} parent=5 // pred_region
        %s389 = ssub.s32 %s15, 2
        // Predicated region
        $region57: #{tpu_custom_call.1} parent=55 // pred_check
          %p390 = pneg %p152
        $region58: #{tpu_custom_call.1} parent=55 // pred_check_branch
          %392 = sbr.rel (%p390) target = $region60
        $region59: #{tpu_custom_call.1} parent=55 // pred_region
          %s393 = sand.u32 %s137, 1
          %s394 = scalar_lea.sflag [#allocation5], %s393
          %s395 = sand.u32 %s137, 1
          %s396 = smul.addr %s395, 8
          %s397 = scalar_lea.vmem [#allocation8], %s396
          %399 = dma.done %s394, 128
        $region60: #{tpu_custom_call.1} parent=55 // pred_fallthru
          _
      $region56: #{tpu_custom_call.1} parent=5 // pred_fallthru
        _
    $region6: #{tpu_custom_call.1} parent=1 // loop_footer
      %s19 = sadd.s32 1, %s15
    $region7: #{tpu_custom_call.1} parent=1 // loop_footer_branch
      %14 = sbr.rel target = $region3
    $region8: #{tpu_custom_call.1} parent=1 // loop_exit
      _
    %400 = vsyncpa [#allocation4], 1
    %s401 = scalar_lea.sflag [#allocation4], 1
    %402 = vsyncpa %s401, 1
    %403 = vsyncpa [#allocation7], 1
    %404 = vsyncpa [#allocation5], 1
    %s405 = scalar_lea.sflag [#allocation5], 1
    %406 = vsyncpa %s405, 1

</llo_original>
